<compile_context>
chip_gen: v7x
topology: tpu7x:2x2x1
jax: 0.10.0
libtpu: 0.0.40
codegen_flags: <defaults>
</compile_context>

<pallas_src>
import jax
import jax.numpy as jnp
from jax.experimental import pallas as pl
from jax.experimental.pallas import tpu as pltpu


def _round_up(x, m):
    return (x + m - 1) // m * m


def _embed_sum_kernel(idx_ref, tab_ref, o_ref):
    # idx_ref: (F, TN) int32 -- per-name node indices, already offset into the
    #                           concatenated table; padded nodes carry -1.
    # tab_ref: (Vp, D)       -- all per-name tables stacked along vocab
    #                           (compute dtype: bf16 or f32).
    # o_ref:   (TN, D) f32   -- sum over names of the looked-up rows.
    idx = idx_ref[...]                                        # (F, TN)
    num_names, tn = idx.shape
    vp = tab_ref.shape[0]

    # Transposed multi-hot: vocab on sublanes, nodes on lanes.  This matches
    # the lane-dense (F, TN) index layout, so no lane->sublane relayout of the
    # indices is needed.  Per-name vocab ranges are disjoint, so an OR of the
    # F compares is the exact multi-hot; a single convert at the end.
    row = jax.lax.broadcasted_iota(jnp.int32, (vp, tn), 0)    # sublane ids
    hit = idx[0:1, :] == row                                  # (Vp, TN) bool
    for i in range(1, num_names):                             # tiny static loop
        hit = jnp.logical_or(hit, idx[i:i + 1, :] == row)
    mh_t = hit.astype(tab_ref.dtype)                          # exact {0, 1}

    # out[n, d] = sum_v mh_t[v, n] * tab[v, d]  -- lhs-transposed MXU matmul
    # with f32 accumulation: exact gather-and-sum of the table rows.
    o_ref[...] = jax.lax.dot_general(
        mh_t, tab_ref[...],
        dimension_numbers=(((0,), (0,)), ((), ())),
        preferred_element_type=jnp.float32)


def atom_embedding_forward(node_features, tables, *, tile_n=2048,
                           compute_dtype=jnp.bfloat16):
    """node_features: (F, N) int array of per-name feature ids.
    tables: list of F embedding tables, each (V_i, D).
    compute_dtype: MXU operand dtype.  bfloat16 (default) keeps the {0,1}
      multi-hot exact and only rounds the table values; float32 reproduces
      nn.Embedding values exactly (emulated f32 MXU path).

    Returns sum_i tables[i][node_features[i]]  -- shape (N, D), float32."""
    num_names = len(tables)
    assert node_features.shape[0] == num_names
    n = int(node_features.shape[1])
    d = int(tables[0].shape[1])

    # Concatenate tables along vocab; pad vocab to a multiple of 128 with zero
    # rows (never addressed by any valid index).
    vocab_sizes = [int(t.shape[0]) for t in tables]
    v_total = sum(vocab_sizes)
    v_pad = _round_up(max(v_total, 128), 128)
    table = jnp.concatenate([t.astype(compute_dtype) for t in tables], axis=0)
    table = jnp.pad(table, ((0, v_pad - v_total), (0, 0)))
    # TODO(synk): for production-sized vocabularies, chunk the vocab axis over
    # an extra "arbitrary" grid dimension (accumulate) or hold the table in a
    # VMEM scratch filled once instead of double-buffering the full table
    # (matters under v7x's 64 MiB VMEM); at Vp=256 it is negligible.

    # Offset each name's indices into its slice of the concatenated table.
    # Indices stay (F, N): names on sublanes, nodes on lanes (lane-dense DMA).
    offsets = jnp.array([sum(vocab_sizes[:i]) for i in range(num_names)],
                        dtype=jnp.int32)
    idx = node_features.astype(jnp.int32) + offsets[:, None]            # (F, N)

    # Balanced node tiles: k grid steps, tile a multiple of 128 (lane-dense idx
    # blocks, full-lane output stores) => padding waste < 128 rows per tile.
    # v7x: force >= 2 steps when N is big enough so ("parallel",) uses both TCs.
    k = pl.cdiv(n, tile_n)
    if k == 1 and n > 512:
        k = 2
    tile = _round_up(pl.cdiv(n, k), 128)
    n_pad = k * tile
    if n_pad != n:
        # Padded nodes get index -1: they match no table row => contribute 0.
        idx = jnp.pad(idx, ((0, 0), (0, n_pad - n)), constant_values=-1)

    out = pl.pallas_call(
        _embed_sum_kernel,
        out_shape=jax.ShapeDtypeStruct((n_pad, d), jnp.float32),
        grid_spec=pltpu.PrefetchScalarGridSpec(
            num_scalar_prefetch=0,
            grid=(k,),
            in_specs=[
                pl.BlockSpec((num_names, tile), lambda i: (0, i)),  # indices
                pl.BlockSpec((v_pad, d), lambda i: (0, 0)),         # table
            ],
            out_specs=pl.BlockSpec((tile, d), lambda i: (i, 0)),
        ),
        compiler_params=pltpu.CompilerParams(
            dimension_semantics=("parallel",),      # v7x: node tiles over 2 TCs
            vmem_limit_bytes=32 * 1024 * 1024,      # headroom over v5e default
        ),
    )(idx, table)
    return out if n_pad == n else out[:n]


if __name__ == "__main__":
    key = jax.random.PRNGKey(0)

    # Small synthetic config matching the module: a few atom feature names,
    # per-name vocab = feature_size + 5, shared embed_dim.
    atom_names = ["atomic_num", "formal_charge", "degree", "chiral_tag"]
    feature_sizes = {"atomic_num": 119, "formal_charge": 11,
                     "degree": 11, "chiral_tag": 4}
    embed_dim = 128          # lane-dense output (multiple of 128)
    num_nodes = 200          # deliberately not a multiple of the tile size

    # Deterministic synthetic nn.Embedding weights, one table per name.
    tables = []
    for name in atom_names:
        vocab = feature_sizes[name] + 5
        key, kw = jax.random.split(key)
        tables.append(
            jax.random.normal(kw, (vocab, embed_dim), dtype=jnp.float32) * 0.1)

    # node_features[i] are integer feature ids for name i, one per node.
    idx_rows = []
    for name in atom_names:
        vocab = feature_sizes[name] + 5
        key, ki = jax.random.split(key)
        idx_rows.append(
            jax.random.randint(ki, (num_nodes,), 0, vocab, dtype=jnp.int32))
    node_features = jnp.stack(idx_rows, axis=0)          # (F, N)

    # --- bf16 MXU path (default): multi-hot is exactly {0,1}, only the table
    #     values see bf16 rounding -> compare against a bf16-quantized reference.
    out_bf16 = jax.block_until_ready(
        atom_embedding_forward(node_features, tables,
                               compute_dtype=jnp.bfloat16))
    ref_bf16 = 0
    for i in range(len(atom_names)):
        tq = tables[i].astype(jnp.bfloat16).astype(jnp.float32)
        ref_bf16 = ref_bf16 + jnp.take(tq, node_features[i], axis=0)
    assert out_bf16.shape == (num_nodes, embed_dim)
    assert jnp.allclose(out_bf16, ref_bf16, atol=1e-4, rtol=1e-4), \
        "bf16 path mismatch vs reference"

    # --- exact f32 path: matches the original nn.Embedding sum.
    out_f32 = jax.block_until_ready(
        atom_embedding_forward(node_features, tables,
                               compute_dtype=jnp.float32))
    ref_f32 = 0
    for i in range(len(atom_names)):
        ref_f32 = ref_f32 + jnp.take(tables[i], node_features[i], axis=0)
    assert out_f32.shape == (num_nodes, embed_dim)
    assert jnp.allclose(out_f32, ref_f32, atol=1e-4, rtol=1e-4), \
        "f32 path mismatch vs reference"

    print("KERNEL_OK")
</pallas_src>

<mosaic_0001>
module attributes {stable_mosaic.version = 11 : i64} {
  func.func @_embed_sum_kernel(%arg0: i32, %arg1: memref<4x256xi32, #tpu.memory_space<vmem>>, %arg2: memref<256x128xbf16, #tpu.memory_space<vmem>>, %arg3: memref<256x128xf32, #tpu.memory_space<vmem>>) attributes {dimension_semantics = [#tpu.dimension_semantics<parallel>], iteration_bounds = array<i64: 1>, scalar_prefetch = 0 : i64, scratch_operands = 0 : i64, tpu.core_type = #tpu.core_type<tc>, window_params = [{transform_indices = @transform_0, window_bounds = array<i64: 4, 256>}, {pipeline_mode = #tpu.pipeline_mode<synchronous>, transform_indices = @transform_1, window_bounds = array<i64: 256, 128>}, {transform_indices = @transform_2, window_bounds = array<i64: 256, 128>}]} {
    %c0 = arith.constant 0 : index
    %c0_0 = arith.constant 0 : index
    %0 = vector.load %arg1[%c0, %c0_0] : memref<4x256xi32, #tpu.memory_space<vmem>>, vector<4x256xi32>
    %1 = tpu.iota {dimensions = array<i32: 0>} : vector<256x256xi32>
    %2 = vector.extract_strided_slice %0 {offsets = [0, 0], sizes = [1, 256], strides = [1, 1]} : vector<4x256xi32> to vector<1x256xi32>
    %3 = vector.broadcast %2 : vector<1x256xi32> to vector<256x256xi32>
    %4 = arith.cmpi eq, %3, %1 : vector<256x256xi32>
    %5 = vector.extract_strided_slice %0 {offsets = [1, 0], sizes = [1, 256], strides = [1, 1]} : vector<4x256xi32> to vector<1x256xi32>
    %6 = vector.broadcast %5 : vector<1x256xi32> to vector<256x256xi32>
    %7 = arith.cmpi eq, %6, %1 : vector<256x256xi32>
    %8 = arith.ori %4, %7 : vector<256x256xi1>
    %9 = vector.extract_strided_slice %0 {offsets = [2, 0], sizes = [1, 256], strides = [1, 1]} : vector<4x256xi32> to vector<1x256xi32>
    %10 = vector.broadcast %9 : vector<1x256xi32> to vector<256x256xi32>
    %11 = arith.cmpi eq, %10, %1 : vector<256x256xi32>
    %12 = arith.ori %8, %11 : vector<256x256xi1>
    %13 = vector.extract_strided_slice %0 {offsets = [3, 0], sizes = [1, 256], strides = [1, 1]} : vector<4x256xi32> to vector<1x256xi32>
    %14 = vector.broadcast %13 : vector<1x256xi32> to vector<256x256xi32>
    %15 = arith.cmpi eq, %14, %1 : vector<256x256xi32>
    %16 = arith.ori %12, %15 : vector<256x256xi1>
    %17 = arith.extui %16 : vector<256x256xi1> to vector<256x256xi32>
    %18 = arith.sitofp %17 : vector<256x256xi32> to vector<256x256xf32>
    %19 = arith.truncf %18 : vector<256x256xf32> to vector<256x256xbf16>
    %c0_1 = arith.constant 0 : index
    %c0_2 = arith.constant 0 : index
    %20 = vector.load %arg2[%c0_1, %c0_2] : memref<256x128xbf16, #tpu.memory_space<vmem>>, vector<256x128xbf16>
    %cst = arith.constant dense<0.000000e+00> : vector<256x128xf32>
    %21 = tpu.matmul %19, %20, %cst {dimension_numbers = #tpu.dot_dimension_numbers<[0], [0], [1], [1], [0, 1, 1, 1], [], []>} : vector<256x256xbf16>, vector<256x128xbf16>, vector<256x128xf32> -> vector<256x128xf32>
    %c0_3 = arith.constant 0 : index
    %c0_4 = arith.constant 0 : index
    %22 = vector.load %arg3[%c0_3, %c0_4] : memref<256x128xf32, #tpu.memory_space<vmem>>, vector<256x128xf32>
    tpu.vector_store %arg3[%c0_3, %c0_4], %21 {strides = array<i32>} : memref<256x128xf32, #tpu.memory_space<vmem>>, vector<256x128xf32>,
    return
  }
  func.func @transform_0(%arg0: i32) -> (i32, i32) {
    %c0_i32 = arith.constant 0 : i32
    %c0_i32_0 = arith.constant 0 : i32
    return %c0_i32, %arg0 : i32, i32
  }
  func.func @transform_1(%arg0: i32) -> (i32, i32) {
    %c0_i32 = arith.constant 0 : i32
    %c0_i32_0 = arith.constant 0 : i32
    %c0_i32_1 = arith.constant 0 : i32
    return %c0_i32, %c0_i32_0 : i32, i32
  }
  func.func @transform_2(%arg0: i32) -> (i32, i32) {
    %c0_i32 = arith.constant 0 : i32
    %c0_i32_0 = arith.constant 0 : i32
    return %arg0, %c0_i32 : i32, i32
  }
}

</mosaic_0001>

<llo_original>
// kernel: tpu_custom_call.1
$region0: #{tpu_custom_call.1}
  #allocation0 [shape = 'u32[]', space=smem, size = 0x4, offset = 0x4, fixed_abs, tag = 'smem constant byte address 0x4 - core index']
  #allocation1 [shape = 'u32[144,128]{1,0:T(1,128)}', space=vmem, size = 0x12000, scoped, tag = 'internal scratch']
  %s0 = inlined_call_operand.hbm [shape: s32[4,256], index: 0, kind: input, shape index: {}]
  %s1 = inlined_call_operand.hbm [shape: bf16[256,128], index: 1, kind: input, shape index: {}]
  %s2 = inlined_call_operand.hbm [shape: f32[256,128], index: 2, kind: output, shape index: {}]
  %s3 = sld [smem:[#allocation0]]
  $region26: #{tpu_custom_call.1} parent=0
    _
  %s5 = ssub.s32 1, %s3
  %s6 = scalar_select 0, %s5, %s3
  $region1: #{tpu_custom_call.1} parent=0
    #allocation2 [shape = 'u8[4096]{0}', space=vmem, size = 0x1000, scoped, tag = 'input window, operand 0, single buffered']
    #allocation3 [shape = 's32[1]{0}', space=sflag, size = 0x4, scoped, tag = 'scoped memory for tpu_custom_call.1']
    #allocation4 [shape = 's32[1]{0}', space=sflag, size = 0x4, scoped, tag = 'scoped memory for tpu_custom_call.1']
    #allocation5 [shape = 'u8[65536]{0}', space=vmem, size = 0x10000, scoped, tag = 'input window, operand 1, single buffered']
    #allocation6 [shape = 's32[1]{0}', space=sflag, size = 0x4, scoped, tag = 'scoped memory for tpu_custom_call.1']
    #allocation7 [shape = 'u8[131072]{0}', space=vmem, size = 0x20000, scoped, tag = 'output window, operand 0, single buffered']
    %7 = vsyncpa [#allocation3], 0
    %8 = vsyncpa [#allocation6], 0
    %9 = vsyncpa [#allocation4], 0
    // Predicated region
    $region2: #{tpu_custom_call.1} parent=1 // pred_check
      _
    $region3: #{tpu_custom_call.1} parent=1 // pred_check_branch
      %11 = sbr.rel (0) target = $region5
    $region4: #{tpu_custom_call.1} parent=1 // pred_region
      %s13 = ssub.s32 128, 128
      %14 = vsyncadd [#allocation3], %s13
      %s16 = sshll.u32 [#allocation2], 4
      %s17 = int_to_ptr.vmem [resolvable:$true] %s16
      %19 = dma.hbm_to_vmem [thread:$0]  %s0, 128, %s17, [#allocation3]
    $region5: #{tpu_custom_call.1} parent=1 // pred_fallthru
      _
    // Predicated region
    $region6: #{tpu_custom_call.1} parent=1 // pred_check
      _
    $region7: #{tpu_custom_call.1} parent=1 // pred_check_branch
      %21 = sbr.rel (0) target = $region9
    $region8: #{tpu_custom_call.1} parent=1 // pred_region
      %s23 = ssub.s32 2048, 2048
      %24 = vsyncadd [#allocation6], %s23
      %s25 = sshll.u32 [#allocation5], 4
      %s26 = int_to_ptr.vmem [resolvable:$true] %s25
      %31 = dma.hbm_to_vmem [thread:$0]  %s1, 2048, %s26, [#allocation6], 64, 64, 4
    $region9: #{tpu_custom_call.1} parent=1 // pred_fallthru
      _
    // Predicated region
    $region10: #{tpu_custom_call.1} parent=1 // pred_check
      _
    $region11: #{tpu_custom_call.1} parent=1 // pred_check_branch
      %33 = sbr.rel (0) target = $region13
    $region12: #{tpu_custom_call.1} parent=1 // pred_region
      %34 = dma.done [#allocation3], 128
    $region13: #{tpu_custom_call.1} parent=1 // pred_fallthru
      _
    // Predicated region
    $region14: #{tpu_custom_call.1} parent=1 // pred_check
      _
    $region15: #{tpu_custom_call.1} parent=1 // pred_check_branch
      %36 = sbr.rel (0) target = $region17
    $region16: #{tpu_custom_call.1} parent=1 // pred_region
      %37 = dma.done [#allocation6], 2048
    $region17: #{tpu_custom_call.1} parent=1 // pred_fallthru
      _
    %v39 = vld [vmem:[#allocation2] sm:$0xff]
    %v40 = vlaneseq
    %v41 = vshrl.u32 %v40, 7
    %v42 = vadd.s32 %v41, 8
    %v43 = vadd.s32 %v41, 16
    %v44 = vadd.s32 %v41, 24
    %v45 = vadd.s32 %v41, 32
    %v46 = vadd.s32 %v41, 40
    %v47 = vadd.s32 %v41, 48
    %v48 = vadd.s32 %v41, 56
    %v49 = vadd.s32 %v41, 64
    %v50 = vadd.s32 %v41, 72
    %v51 = vadd.s32 %v41, 80
    %v52 = vadd.s32 %v41, 88
    %v53 = vadd.s32 %v41, 96
    %v54 = vadd.s32 %v41, 104
    %v55 = vadd.s32 %v41, 112
    %v56 = vadd.s32 %v41, 120
    %v57 = vadd.s32 %v41, 128
    %v58 = vadd.s32 %v41, 136
    %v59 = vadd.s32 %v41, 144
    %v60 = vadd.s32 %v41, 152
    %v61 = vadd.s32 %v41, 160
    %v62 = vadd.s32 %v41, 168
    %v63 = vadd.s32 %v41, 176
    %v64 = vadd.s32 %v41, 184
    %v65 = vadd.s32 %v41, 192
    %v66 = vadd.s32 %v41, 200
    %v67 = vadd.s32 %v41, 208
    %v68 = vadd.s32 %v41, 216
    %v69 = vadd.s32 %v41, 224
    %v70 = vadd.s32 %v41, 232
    %v71 = vadd.s32 %v41, 240
    %v72 = vadd.s32 %v41, 248
    %v73 = vlaneseq
    %v74 = vshrl.u32 %v73, 7
    %v75 = vsub.s32 0, %v74
    %v76 = vrot.slane %v39, %v75
    %v77 = vlaneseq
    %v78 = vshrl.u32 %v77, 7
    %v79 = vsub.s32 4, %v78
    %v80 = vrot.slane %v39, %v79
    %v81 = vlaneseq
    %v82 = vshrl.u32 %v81, 7
    %v83 = vsub.s32 0, %v82
    %v84 = vrot.slane %v76, %v83
    %v85 = vlaneseq
    %v86 = vshrl.u32 %v85, 7
    %v87 = vsub.s32 0, %v86
    %v88 = vrot.slane %v80, %v87
    %vm89 = vcmp.eq.s32.totalorder %v84, %v41
    %vm90 = vcmp.eq.s32.totalorder %v88, %v41
    %vm91 = vcmp.eq.s32.totalorder %v84, %v42
    %vm92 = vcmp.eq.s32.totalorder %v88, %v42
    %vm93 = vcmp.eq.s32.totalorder %v84, %v43
    %vm94 = vcmp.eq.s32.totalorder %v88, %v43
    %vm95 = vcmp.eq.s32.totalorder %v84, %v44
    %vm96 = vcmp.eq.s32.totalorder %v88, %v44
    %vm97 = vcmp.eq.s32.totalorder %v84, %v45
    %vm98 = vcmp.eq.s32.totalorder %v88, %v45
    %vm99 = vcmp.eq.s32.totalorder %v84, %v46
    %vm100 = vcmp.eq.s32.totalorder %v88, %v46
    %vm101 = vcmp.eq.s32.totalorder %v84, %v47
    %vm102 = vcmp.eq.s32.totalorder %v88, %v47
    %vm103 = vcmp.eq.s32.totalorder %v84, %v48
    %vm104 = vcmp.eq.s32.totalorder %v88, %v48
    %vm105 = vcmp.eq.s32.totalorder %v84, %v49
    %vm106 = vcmp.eq.s32.totalorder %v88, %v49
    %vm107 = vcmp.eq.s32.totalorder %v84, %v50
    %vm108 = vcmp.eq.s32.totalorder %v88, %v50
    %vm109 = vcmp.eq.s32.totalorder %v84, %v51
    %vm110 = vcmp.eq.s32.totalorder %v88, %v51
    %vm111 = vcmp.eq.s32.totalorder %v84, %v52
    %vm112 = vcmp.eq.s32.totalorder %v88, %v52
    %vm113 = vcmp.eq.s32.totalorder %v84, %v53
    %vm114 = vcmp.eq.s32.totalorder %v88, %v53
    %vm115 = vcmp.eq.s32.totalorder %v84, %v54
    %vm116 = vcmp.eq.s32.totalorder %v88, %v54
    %vm117 = vcmp.eq.s32.totalorder %v84, %v55
    %vm118 = vcmp.eq.s32.totalorder %v88, %v55
    %vm119 = vcmp.eq.s32.totalorder %v84, %v56
    %vm120 = vcmp.eq.s32.totalorder %v88, %v56
    %vm121 = vcmp.eq.s32.totalorder %v84, %v57
    %vm122 = vcmp.eq.s32.totalorder %v88, %v57
    %vm123 = vcmp.eq.s32.totalorder %v84, %v58
    %vm124 = vcmp.eq.s32.totalorder %v88, %v58
    %vm125 = vcmp.eq.s32.totalorder %v84, %v59
    %vm126 = vcmp.eq.s32.totalorder %v88, %v59
    %vm127 = vcmp.eq.s32.totalorder %v84, %v60
    %vm128 = vcmp.eq.s32.totalorder %v88, %v60
    %vm129 = vcmp.eq.s32.totalorder %v84, %v61
    %vm130 = vcmp.eq.s32.totalorder %v88, %v61
    %vm131 = vcmp.eq.s32.totalorder %v84, %v62
    %vm132 = vcmp.eq.s32.totalorder %v88, %v62
    %vm133 = vcmp.eq.s32.totalorder %v84, %v63
    %vm134 = vcmp.eq.s32.totalorder %v88, %v63
    %vm135 = vcmp.eq.s32.totalorder %v84, %v64
    %vm136 = vcmp.eq.s32.totalorder %v88, %v64
    %vm137 = vcmp.eq.s32.totalorder %v84, %v65
    %vm138 = vcmp.eq.s32.totalorder %v88, %v65
    %vm139 = vcmp.eq.s32.totalorder %v84, %v66
    %vm140 = vcmp.eq.s32.totalorder %v88, %v66
    %vm141 = vcmp.eq.s32.totalorder %v84, %v67
    %vm142 = vcmp.eq.s32.totalorder %v88, %v67
    %vm143 = vcmp.eq.s32.totalorder %v84, %v68
    %vm144 = vcmp.eq.s32.totalorder %v88, %v68
    %vm145 = vcmp.eq.s32.totalorder %v84, %v69
    %vm146 = vcmp.eq.s32.totalorder %v88, %v69
    %vm147 = vcmp.eq.s32.totalorder %v84, %v70
    %vm148 = vcmp.eq.s32.totalorder %v88, %v70
    %vm149 = vcmp.eq.s32.totalorder %v84, %v71
    %vm150 = vcmp.eq.s32.totalorder %v88, %v71
    %vm151 = vcmp.eq.s32.totalorder %v84, %v72
    %vm152 = vcmp.eq.s32.totalorder %v88, %v72
    %v153 = vlaneseq
    %v154 = vshrl.u32 %v153, 7
    %v155 = vsub.s32 1, %v154
    %v156 = vrot.slane %v39, %v155
    %v157 = vlaneseq
    %v158 = vshrl.u32 %v157, 7
    %v159 = vsub.s32 5, %v158
    %v160 = vrot.slane %v39, %v159
    %v161 = vlaneseq
    %v162 = vshrl.u32 %v161, 7
    %v163 = vsub.s32 1, %v162
    %v164 = vrot.slane %v156, %v163
    %v165 = vlaneseq
    %v166 = vshrl.u32 %v165, 7
    %v167 = vsub.s32 1, %v166
    %v168 = vrot.slane %v160, %v167
    %vm169 = vcmp.eq.s32.totalorder %v164, %v41
    %vm170 = vcmp.eq.s32.totalorder %v168, %v41
    %vm171 = vcmp.eq.s32.totalorder %v164, %v42
    %vm172 = vcmp.eq.s32.totalorder %v168, %v42
    %vm173 = vcmp.eq.s32.totalorder %v164, %v43
    %vm174 = vcmp.eq.s32.totalorder %v168, %v43
    %vm175 = vcmp.eq.s32.totalorder %v164, %v44
    %vm176 = vcmp.eq.s32.totalorder %v168, %v44
    %vm177 = vcmp.eq.s32.totalorder %v164, %v45
    %vm178 = vcmp.eq.s32.totalorder %v168, %v45
    %vm179 = vcmp.eq.s32.totalorder %v164, %v46
    %vm180 = vcmp.eq.s32.totalorder %v168, %v46
    %vm181 = vcmp.eq.s32.totalorder %v164, %v47
    %vm182 = vcmp.eq.s32.totalorder %v168, %v47
    %vm183 = vcmp.eq.s32.totalorder %v164, %v48
    %vm184 = vcmp.eq.s32.totalorder %v168, %v48
    %vm185 = vcmp.eq.s32.totalorder %v164, %v49
    %vm186 = vcmp.eq.s32.totalorder %v168, %v49
    %vm187 = vcmp.eq.s32.totalorder %v164, %v50
    %vm188 = vcmp.eq.s32.totalorder %v168, %v50
    %vm189 = vcmp.eq.s32.totalorder %v164, %v51
    %vm190 = vcmp.eq.s32.totalorder %v168, %v51
    %vm191 = vcmp.eq.s32.totalorder %v164, %v52
    %vm192 = vcmp.eq.s32.totalorder %v168, %v52
    %vm193 = vcmp.eq.s32.totalorder %v164, %v53
    %vm194 = vcmp.eq.s32.totalorder %v168, %v53
    %vm195 = vcmp.eq.s32.totalorder %v164, %v54
    %vm196 = vcmp.eq.s32.totalorder %v168, %v54
    %vm197 = vcmp.eq.s32.totalorder %v164, %v55
    %vm198 = vcmp.eq.s32.totalorder %v168, %v55
    %vm199 = vcmp.eq.s32.totalorder %v164, %v56
    %vm200 = vcmp.eq.s32.totalorder %v168, %v56
    %vm201 = vcmp.eq.s32.totalorder %v164, %v57
    %vm202 = vcmp.eq.s32.totalorder %v168, %v57
    %vm203 = vcmp.eq.s32.totalorder %v164, %v58
    %vm204 = vcmp.eq.s32.totalorder %v168, %v58
    %vm205 = vcmp.eq.s32.totalorder %v164, %v59
    %vm206 = vcmp.eq.s32.totalorder %v168, %v59
    %vm207 = vcmp.eq.s32.totalorder %v164, %v60
    %vm208 = vcmp.eq.s32.totalorder %v168, %v60
    %vm209 = vcmp.eq.s32.totalorder %v164, %v61
    %vm210 = vcmp.eq.s32.totalorder %v168, %v61
    %vm211 = vcmp.eq.s32.totalorder %v164, %v62
    %vm212 = vcmp.eq.s32.totalorder %v168, %v62
    %vm213 = vcmp.eq.s32.totalorder %v164, %v63
    %vm214 = vcmp.eq.s32.totalorder %v168, %v63
    %vm215 = vcmp.eq.s32.totalorder %v164, %v64
    %vm216 = vcmp.eq.s32.totalorder %v168, %v64
    %vm217 = vcmp.eq.s32.totalorder %v164, %v65
    %vm218 = vcmp.eq.s32.totalorder %v168, %v65
    %vm219 = vcmp.eq.s32.totalorder %v164, %v66
    %vm220 = vcmp.eq.s32.totalorder %v168, %v66
    %vm221 = vcmp.eq.s32.totalorder %v164, %v67
    %vm222 = vcmp.eq.s32.totalorder %v168, %v67
    %vm223 = vcmp.eq.s32.totalorder %v164, %v68
    %vm224 = vcmp.eq.s32.totalorder %v168, %v68
    %vm225 = vcmp.eq.s32.totalorder %v164, %v69
    %vm226 = vcmp.eq.s32.totalorder %v168, %v69
    %vm227 = vcmp.eq.s32.totalorder %v164, %v70
    %vm228 = vcmp.eq.s32.totalorder %v168, %v70
    %vm229 = vcmp.eq.s32.totalorder %v164, %v71
    %vm230 = vcmp.eq.s32.totalorder %v168, %v71
    %vm231 = vcmp.eq.s32.totalorder %v164, %v72
    %vm232 = vcmp.eq.s32.totalorder %v168, %v72
    %vm233 = vmor %vm89, %vm169
    %vm234 = vmor %vm90, %vm170
    %vm235 = vmor %vm91, %vm171
    %vm236 = vmor %vm92, %vm172
    %vm237 = vmor %vm93, %vm173
    %vm238 = vmor %vm94, %vm174
    %vm239 = vmor %vm95, %vm175
    %vm240 = vmor %vm96, %vm176
    %vm241 = vmor %vm97, %vm177
    %vm242 = vmor %vm98, %vm178
    %vm243 = vmor %vm99, %vm179
    %vm244 = vmor %vm100, %vm180
    %vm245 = vmor %vm101, %vm181
    %vm246 = vmor %vm102, %vm182
    %vm247 = vmor %vm103, %vm183
    %vm248 = vmor %vm104, %vm184
    %vm249 = vmor %vm105, %vm185
    %vm250 = vmor %vm106, %vm186
    %vm251 = vmor %vm107, %vm187
    %vm252 = vmor %vm108, %vm188
    %vm253 = vmor %vm109, %vm189
    %vm254 = vmor %vm110, %vm190
    %vm255 = vmor %vm111, %vm191
    %vm256 = vmor %vm112, %vm192
    %vm257 = vmor %vm113, %vm193
    %vm258 = vmor %vm114, %vm194
    %vm259 = vmor %vm115, %vm195
    %vm260 = vmor %vm116, %vm196
    %vm261 = vmor %vm117, %vm197
    %vm262 = vmor %vm118, %vm198
    %vm263 = vmor %vm119, %vm199
    %vm264 = vmor %vm120, %vm200
    %vm265 = vmor %vm121, %vm201
    %vm266 = vmor %vm122, %vm202
    %vm267 = vmor %vm123, %vm203
    %vm268 = vmor %vm124, %vm204
    %vm269 = vmor %vm125, %vm205
    %vm270 = vmor %vm126, %vm206
    %vm271 = vmor %vm127, %vm207
    %vm272 = vmor %vm128, %vm208
    %vm273 = vmor %vm129, %vm209
    %vm274 = vmor %vm130, %vm210
    %vm275 = vmor %vm131, %vm211
    %vm276 = vmor %vm132, %vm212
    %vm277 = vmor %vm133, %vm213
    %vm278 = vmor %vm134, %vm214
    %vm279 = vmor %vm135, %vm215
    %vm280 = vmor %vm136, %vm216
    %vm281 = vmor %vm137, %vm217
    %vm282 = vmor %vm138, %vm218
    %vm283 = vmor %vm139, %vm219
    %vm284 = vmor %vm140, %vm220
    %vm285 = vmor %vm141, %vm221
    %vm286 = vmor %vm142, %vm222
    %vm287 = vmor %vm143, %vm223
    %vm288 = vmor %vm144, %vm224
    %vm289 = vmor %vm145, %vm225
    %vm290 = vmor %vm146, %vm226
    %vm291 = vmor %vm147, %vm227
    %vm292 = vmor %vm148, %vm228
    %vm293 = vmor %vm149, %vm229
    %vm294 = vmor %vm150, %vm230
    %vm295 = vmor %vm151, %vm231
    %vm296 = vmor %vm152, %vm232
    %v297 = vlaneseq
    %v298 = vshrl.u32 %v297, 7
    %v299 = vsub.s32 2, %v298
    %v300 = vrot.slane %v39, %v299
    %v301 = vlaneseq
    %v302 = vshrl.u32 %v301, 7
    %v303 = vsub.s32 6, %v302
    %v304 = vrot.slane %v39, %v303
    %v305 = vlaneseq
    %v306 = vshrl.u32 %v305, 7
    %v307 = vsub.s32 2, %v306
    %v308 = vrot.slane %v300, %v307
    %v309 = vlaneseq
    %v310 = vshrl.u32 %v309, 7
    %v311 = vsub.s32 2, %v310
    %v312 = vrot.slane %v304, %v311
    %vm313 = vcmp.eq.s32.totalorder %v308, %v41
    %vm314 = vcmp.eq.s32.totalorder %v312, %v41
    %vm315 = vcmp.eq.s32.totalorder %v308, %v42
    %vm316 = vcmp.eq.s32.totalorder %v312, %v42
    %vm317 = vcmp.eq.s32.totalorder %v308, %v43
    %vm318 = vcmp.eq.s32.totalorder %v312, %v43
    %vm319 = vcmp.eq.s32.totalorder %v308, %v44
    %vm320 = vcmp.eq.s32.totalorder %v312, %v44
    %vm321 = vcmp.eq.s32.totalorder %v308, %v45
    %vm322 = vcmp.eq.s32.totalorder %v312, %v45
    %vm323 = vcmp.eq.s32.totalorder %v308, %v46
    %vm324 = vcmp.eq.s32.totalorder %v312, %v46
    %vm325 = vcmp.eq.s32.totalorder %v308, %v47
    %vm326 = vcmp.eq.s32.totalorder %v312, %v47
    %vm327 = vcmp.eq.s32.totalorder %v308, %v48
    %vm328 = vcmp.eq.s32.totalorder %v312, %v48
    %vm329 = vcmp.eq.s32.totalorder %v308, %v49
    %vm330 = vcmp.eq.s32.totalorder %v312, %v49
    %vm331 = vcmp.eq.s32.totalorder %v308, %v50
    %vm332 = vcmp.eq.s32.totalorder %v312, %v50
    %vm333 = vcmp.eq.s32.totalorder %v308, %v51
    %vm334 = vcmp.eq.s32.totalorder %v312, %v51
    %vm335 = vcmp.eq.s32.totalorder %v308, %v52
    %vm336 = vcmp.eq.s32.totalorder %v312, %v52
    %vm337 = vcmp.eq.s32.totalorder %v308, %v53
    %vm338 = vcmp.eq.s32.totalorder %v312, %v53
    %vm339 = vcmp.eq.s32.totalorder %v308, %v54
    %vm340 = vcmp.eq.s32.totalorder %v312, %v54
    %vm341 = vcmp.eq.s32.totalorder %v308, %v55
    %vm342 = vcmp.eq.s32.totalorder %v312, %v55
    %vm343 = vcmp.eq.s32.totalorder %v308, %v56
    %vm344 = vcmp.eq.s32.totalorder %v312, %v56
    %vm345 = vcmp.eq.s32.totalorder %v308, %v57
    %vm346 = vcmp.eq.s32.totalorder %v312, %v57
    %vm347 = vcmp.eq.s32.totalorder %v308, %v58
    %vm348 = vcmp.eq.s32.totalorder %v312, %v58
    %vm349 = vcmp.eq.s32.totalorder %v308, %v59
    %vm350 = vcmp.eq.s32.totalorder %v312, %v59
    %vm351 = vcmp.eq.s32.totalorder %v308, %v60
    %vm352 = vcmp.eq.s32.totalorder %v312, %v60
    %vm353 = vcmp.eq.s32.totalorder %v308, %v61
    %vm354 = vcmp.eq.s32.totalorder %v312, %v61
    %vm355 = vcmp.eq.s32.totalorder %v308, %v62
    %vm356 = vcmp.eq.s32.totalorder %v312, %v62
    %vm357 = vcmp.eq.s32.totalorder %v308, %v63
    %vm358 = vcmp.eq.s32.totalorder %v312, %v63
    %vm359 = vcmp.eq.s32.totalorder %v308, %v64
    %vm360 = vcmp.eq.s32.totalorder %v312, %v64
    %vm361 = vcmp.eq.s32.totalorder %v308, %v65
    %vm362 = vcmp.eq.s32.totalorder %v312, %v65
    %vm363 = vcmp.eq.s32.totalorder %v308, %v66
    %vm364 = vcmp.eq.s32.totalorder %v312, %v66
    %vm365 = vcmp.eq.s32.totalorder %v308, %v67
    %vm366 = vcmp.eq.s32.totalorder %v312, %v67
    %vm367 = vcmp.eq.s32.totalorder %v308, %v68
    %vm368 = vcmp.eq.s32.totalorder %v312, %v68
    %vm369 = vcmp.eq.s32.totalorder %v308, %v69
    %vm370 = vcmp.eq.s32.totalorder %v312, %v69
    %vm371 = vcmp.eq.s32.totalorder %v308, %v70
    %vm372 = vcmp.eq.s32.totalorder %v312, %v70
    %vm373 = vcmp.eq.s32.totalorder %v308, %v71
    %vm374 = vcmp.eq.s32.totalorder %v312, %v71
    %vm375 = vcmp.eq.s32.totalorder %v308, %v72
    %vm376 = vcmp.eq.s32.totalorder %v312, %v72
    %vm377 = vmor %vm233, %vm313
    %vm378 = vmor %vm234, %vm314
    %vm379 = vmor %vm235, %vm315
    %vm380 = vmor %vm236, %vm316
    %vm381 = vmor %vm237, %vm317
    %vm382 = vmor %vm238, %vm318
    %vm383 = vmor %vm239, %vm319
    %vm384 = vmor %vm240, %vm320
    %vm385 = vmor %vm241, %vm321
    %vm386 = vmor %vm242, %vm322
    %vm387 = vmor %vm243, %vm323
    %vm388 = vmor %vm244, %vm324
    %vm389 = vmor %vm245, %vm325
    %vm390 = vmor %vm246, %vm326
    %vm391 = vmor %vm247, %vm327
    %vm392 = vmor %vm248, %vm328
    %vm393 = vmor %vm249, %vm329
    %vm394 = vmor %vm250, %vm330
    %vm395 = vmor %vm251, %vm331
    %vm396 = vmor %vm252, %vm332
    %vm397 = vmor %vm253, %vm333
    %vm398 = vmor %vm254, %vm334
    %vm399 = vmor %vm255, %vm335
    %vm400 = vmor %vm256, %vm336
    %vm401 = vmor %vm257, %vm337
    %vm402 = vmor %vm258, %vm338
    %vm403 = vmor %vm259, %vm339
    %vm404 = vmor %vm260, %vm340
    %vm405 = vmor %vm261, %vm341
    %vm406 = vmor %vm262, %vm342
    %vm407 = vmor %vm263, %vm343
    %vm408 = vmor %vm264, %vm344
    %vm409 = vmor %vm265, %vm345
    %vm410 = vmor %vm266, %vm346
    %vm411 = vmor %vm267, %vm347
    %vm412 = vmor %vm268, %vm348
    %vm413 = vmor %vm269, %vm349
    %vm414 = vmor %vm270, %vm350
    %vm415 = vmor %vm271, %vm351
    %vm416 = vmor %vm272, %vm352
    %vm417 = vmor %vm273, %vm353
    %vm418 = vmor %vm274, %vm354
    %vm419 = vmor %vm275, %vm355
    %vm420 = vmor %vm276, %vm356
    %vm421 = vmor %vm277, %vm357
    %vm422 = vmor %vm278, %vm358
    %vm423 = vmor %vm279, %vm359
    %vm424 = vmor %vm280, %vm360
    %vm425 = vmor %vm281, %vm361
    %vm426 = vmor %vm282, %vm362
    %vm427 = vmor %vm283, %vm363
    %vm428 = vmor %vm284, %vm364
    %vm429 = vmor %vm285, %vm365
    %vm430 = vmor %vm286, %vm366
    %vm431 = vmor %vm287, %vm367
    %vm432 = vmor %vm288, %vm368
    %vm433 = vmor %vm289, %vm369
    %vm434 = vmor %vm290, %vm370
    %vm435 = vmor %vm291, %vm371
    %vm436 = vmor %vm292, %vm372
    %vm437 = vmor %vm293, %vm373
    %vm438 = vmor %vm294, %vm374
    %vm439 = vmor %vm295, %vm375
    %vm440 = vmor %vm296, %vm376
    %v441 = vlaneseq
    %v442 = vshrl.u32 %v441, 7
    %v443 = vsub.s32 3, %v442
    %v444 = vrot.slane %v39, %v443
    %v445 = vlaneseq
    %v446 = vshrl.u32 %v445, 7
    %v447 = vsub.s32 7, %v446
    %v448 = vrot.slane %v39, %v447
    %v449 = vlaneseq
    %v450 = vshrl.u32 %v449, 7
    %v451 = vsub.s32 3, %v450
    %v452 = vrot.slane %v444, %v451
    %v453 = vlaneseq
    %v454 = vshrl.u32 %v453, 7
    %v455 = vsub.s32 3, %v454
    %v456 = vrot.slane %v448, %v455
    %vm457 = vcmp.eq.s32.totalorder %v452, %v41
    %vm458 = vcmp.eq.s32.totalorder %v456, %v41
    %vm459 = vcmp.eq.s32.totalorder %v452, %v42
    %vm460 = vcmp.eq.s32.totalorder %v456, %v42
    %vm461 = vcmp.eq.s32.totalorder %v452, %v43
    %vm462 = vcmp.eq.s32.totalorder %v456, %v43
    %vm463 = vcmp.eq.s32.totalorder %v452, %v44
    %vm464 = vcmp.eq.s32.totalorder %v456, %v44
    %vm465 = vcmp.eq.s32.totalorder %v452, %v45
    %vm466 = vcmp.eq.s32.totalorder %v456, %v45
    %vm467 = vcmp.eq.s32.totalorder %v452, %v46
    %vm468 = vcmp.eq.s32.totalorder %v456, %v46
    %vm469 = vcmp.eq.s32.totalorder %v452, %v47
    %vm470 = vcmp.eq.s32.totalorder %v456, %v47
    %vm471 = vcmp.eq.s32.totalorder %v452, %v48
    %vm472 = vcmp.eq.s32.totalorder %v456, %v48
    %vm473 = vcmp.eq.s32.totalorder %v452, %v49
    %vm474 = vcmp.eq.s32.totalorder %v456, %v49
    %vm475 = vcmp.eq.s32.totalorder %v452, %v50
    %vm476 = vcmp.eq.s32.totalorder %v456, %v50
    %vm477 = vcmp.eq.s32.totalorder %v452, %v51
    %vm478 = vcmp.eq.s32.totalorder %v456, %v51
    %vm479 = vcmp.eq.s32.totalorder %v452, %v52
    %vm480 = vcmp.eq.s32.totalorder %v456, %v52
    %vm481 = vcmp.eq.s32.totalorder %v452, %v53
    %vm482 = vcmp.eq.s32.totalorder %v456, %v53
    %vm483 = vcmp.eq.s32.totalorder %v452, %v54
    %vm484 = vcmp.eq.s32.totalorder %v456, %v54
    %vm485 = vcmp.eq.s32.totalorder %v452, %v55
    %vm486 = vcmp.eq.s32.totalorder %v456, %v55
    %vm487 = vcmp.eq.s32.totalorder %v452, %v56
    %vm488 = vcmp.eq.s32.totalorder %v456, %v56
    %vm489 = vcmp.eq.s32.totalorder %v452, %v57
    %vm490 = vcmp.eq.s32.totalorder %v456, %v57
    %vm491 = vcmp.eq.s32.totalorder %v452, %v58
    %vm492 = vcmp.eq.s32.totalorder %v456, %v58
    %vm493 = vcmp.eq.s32.totalorder %v452, %v59
    %vm494 = vcmp.eq.s32.totalorder %v456, %v59
    %vm495 = vcmp.eq.s32.totalorder %v452, %v60
    %vm496 = vcmp.eq.s32.totalorder %v456, %v60
    %vm497 = vcmp.eq.s32.totalorder %v452, %v61
    %vm498 = vcmp.eq.s32.totalorder %v456, %v61
    %vm499 = vcmp.eq.s32.totalorder %v452, %v62
    %vm500 = vcmp.eq.s32.totalorder %v456, %v62
    %vm501 = vcmp.eq.s32.totalorder %v452, %v63
    %vm502 = vcmp.eq.s32.totalorder %v456, %v63
    %vm503 = vcmp.eq.s32.totalorder %v452, %v64
    %vm504 = vcmp.eq.s32.totalorder %v456, %v64
    %vm505 = vcmp.eq.s32.totalorder %v452, %v65
    %vm506 = vcmp.eq.s32.totalorder %v456, %v65
    %vm507 = vcmp.eq.s32.totalorder %v452, %v66
    %vm508 = vcmp.eq.s32.totalorder %v456, %v66
    %vm509 = vcmp.eq.s32.totalorder %v452, %v67
    %vm510 = vcmp.eq.s32.totalorder %v456, %v67
    %vm511 = vcmp.eq.s32.totalorder %v452, %v68
    %vm512 = vcmp.eq.s32.totalorder %v456, %v68
    %vm513 = vcmp.eq.s32.totalorder %v452, %v69
    %vm514 = vcmp.eq.s32.totalorder %v456, %v69
    %vm515 = vcmp.eq.s32.totalorder %v452, %v70
    %vm516 = vcmp.eq.s32.totalorder %v456, %v70
    %vm517 = vcmp.eq.s32.totalorder %v452, %v71
    %vm518 = vcmp.eq.s32.totalorder %v456, %v71
    %vm519 = vcmp.eq.s32.totalorder %v452, %v72
    %vm520 = vcmp.eq.s32.totalorder %v456, %v72
    %vm521 = vmor %vm377, %vm457
    %vm522 = vmor %vm378, %vm458
    %vm523 = vmor %vm379, %vm459
    %vm524 = vmor %vm380, %vm460
    %vm525 = vmor %vm381, %vm461
    %vm526 = vmor %vm382, %vm462
    %vm527 = vmor %vm383, %vm463
    %vm528 = vmor %vm384, %vm464
    %vm529 = vmor %vm385, %vm465
    %vm530 = vmor %vm386, %vm466
    %vm531 = vmor %vm387, %vm467
    %vm532 = vmor %vm388, %vm468
    %vm533 = vmor %vm389, %vm469
    %vm534 = vmor %vm390, %vm470
    %vm535 = vmor %vm391, %vm471
    %vm536 = vmor %vm392, %vm472
    %vm537 = vmor %vm393, %vm473
    %vm538 = vmor %vm394, %vm474
    %vm539 = vmor %vm395, %vm475
    %vm540 = vmor %vm396, %vm476
    %vm541 = vmor %vm397, %vm477
    %vm542 = vmor %vm398, %vm478
    %vm543 = vmor %vm399, %vm479
    %vm544 = vmor %vm400, %vm480
    %vm545 = vmor %vm401, %vm481
    %vm546 = vmor %vm402, %vm482
    %vm547 = vmor %vm403, %vm483
    %vm548 = vmor %vm404, %vm484
    %vm549 = vmor %vm405, %vm485
    %vm550 = vmor %vm406, %vm486
    %vm551 = vmor %vm407, %vm487
    %vm552 = vmor %vm408, %vm488
    %vm553 = vmor %vm409, %vm489
    %vm554 = vmor %vm410, %vm490
    %vm555 = vmor %vm411, %vm491
    %vm556 = vmor %vm412, %vm492
    %vm557 = vmor %vm413, %vm493
    %vm558 = vmor %vm414, %vm494
    %vm559 = vmor %vm415, %vm495
    %vm560 = vmor %vm416, %vm496
    %vm561 = vmor %vm417, %vm497
    %vm562 = vmor %vm418, %vm498
    %vm563 = vmor %vm419, %vm499
    %vm564 = vmor %vm420, %vm500
    %vm565 = vmor %vm421, %vm501
    %vm566 = vmor %vm422, %vm502
    %vm567 = vmor %vm423, %vm503
    %vm568 = vmor %vm424, %vm504
    %vm569 = vmor %vm425, %vm505
    %vm570 = vmor %vm426, %vm506
    %vm571 = vmor %vm427, %vm507
    %vm572 = vmor %vm428, %vm508
    %vm573 = vmor %vm429, %vm509
    %vm574 = vmor %vm430, %vm510
    %vm575 = vmor %vm431, %vm511
    %vm576 = vmor %vm432, %vm512
    %vm577 = vmor %vm433, %vm513
    %vm578 = vmor %vm434, %vm514
    %vm579 = vmor %vm435, %vm515
    %vm580 = vmor %vm436, %vm516
    %vm581 = vmor %vm437, %vm517
    %vm582 = vmor %vm438, %vm518
    %vm583 = vmor %vm439, %vm519
    %vm584 = vmor %vm440, %vm520
    %v585 = vsel %vm521, 1, 0
    %v586 = vsel %vm522, 1, 0
    %v587 = vsel %vm523, 1, 0
    %v588 = vsel %vm524, 1, 0
    %v589 = vsel %vm525, 1, 0
    %v590 = vsel %vm526, 1, 0
    %v591 = vsel %vm527, 1, 0
    %v592 = vsel %vm528, 1, 0
    %v593 = vsel %vm529, 1, 0
    %v594 = vsel %vm530, 1, 0
    %v595 = vsel %vm531, 1, 0
    %v596 = vsel %vm532, 1, 0
    %v597 = vsel %vm533, 1, 0
    %v598 = vsel %vm534, 1, 0
    %v599 = vsel %vm535, 1, 0
    %v600 = vsel %vm536, 1, 0
    %v601 = vsel %vm537, 1, 0
    %v602 = vsel %vm538, 1, 0
    %v603 = vsel %vm539, 1, 0
    %v604 = vsel %vm540, 1, 0
    %v605 = vsel %vm541, 1, 0
    %v606 = vsel %vm542, 1, 0
    %v607 = vsel %vm543, 1, 0
    %v608 = vsel %vm544, 1, 0
    %v609 = vsel %vm545, 1, 0
    %v610 = vsel %vm546, 1, 0
    %v611 = vsel %vm547, 1, 0
    %v612 = vsel %vm548, 1, 0
    %v613 = vsel %vm549, 1, 0
    %v614 = vsel %vm550, 1, 0
    %v615 = vsel %vm551, 1, 0
    %v616 = vsel %vm552, 1, 0
    %v617 = vsel %vm553, 1, 0
    %v618 = vsel %vm554, 1, 0
    %v619 = vsel %vm555, 1, 0
    %v620 = vsel %vm556, 1, 0
    %v621 = vsel %vm557, 1, 0
    %v622 = vsel %vm558, 1, 0
    %v623 = vsel %vm559, 1, 0
    %v624 = vsel %vm560, 1, 0
    %v625 = vsel %vm561, 1, 0
    %v626 = vsel %vm562, 1, 0
    %v627 = vsel %vm563, 1, 0
    %v628 = vsel %vm564, 1, 0
    %v629 = vsel %vm565, 1, 0
    %v630 = vsel %vm566, 1, 0
    %v631 = vsel %vm567, 1, 0
    %v632 = vsel %vm568, 1, 0
    %v633 = vsel %vm569, 1, 0
    %v634 = vsel %vm570, 1, 0
    %v635 = vsel %vm571, 1, 0
    %v636 = vsel %vm572, 1, 0
    %v637 = vsel %vm573, 1, 0
    %v638 = vsel %vm574, 1, 0
    %v639 = vsel %vm575, 1, 0
    %v640 = vsel %vm576, 1, 0
    %v641 = vsel %vm577, 1, 0
    %v642 = vsel %vm578, 1, 0
    %v643 = vsel %vm579, 1, 0
    %v644 = vsel %vm580, 1, 0
    %v645 = vsel %vm581, 1, 0
    %v646 = vsel %vm582, 1, 0
    %v647 = vsel %vm583, 1, 0
    %v648 = vsel %vm584, 1, 0
    %v649 = vcvt.s32.f32 %v585
    %v650 = vcvt.s32.f32 %v586
    %v651 = vcvt.s32.f32 %v587
    %v652 = vcvt.s32.f32 %v588
    %v653 = vcvt.s32.f32 %v589
    %v654 = vcvt.s32.f32 %v590
    %v655 = vcvt.s32.f32 %v591
    %v656 = vcvt.s32.f32 %v592
    %v657 = vcvt.s32.f32 %v593
    %v658 = vcvt.s32.f32 %v594
    %v659 = vcvt.s32.f32 %v595
    %v660 = vcvt.s32.f32 %v596
    %v661 = vcvt.s32.f32 %v597
    %v662 = vcvt.s32.f32 %v598
    %v663 = vcvt.s32.f32 %v599
    %v664 = vcvt.s32.f32 %v600
    %v665 = vcvt.s32.f32 %v601
    %v666 = vcvt.s32.f32 %v602
    %v667 = vcvt.s32.f32 %v603
    %v668 = vcvt.s32.f32 %v604
    %v669 = vcvt.s32.f32 %v605
    %v670 = vcvt.s32.f32 %v606
    %v671 = vcvt.s32.f32 %v607
    %v672 = vcvt.s32.f32 %v608
    %v673 = vcvt.s32.f32 %v609
    %v674 = vcvt.s32.f32 %v610
    %v675 = vcvt.s32.f32 %v611
    %v676 = vcvt.s32.f32 %v612
    %v677 = vcvt.s32.f32 %v613
    %v678 = vcvt.s32.f32 %v614
    %v679 = vcvt.s32.f32 %v615
    %v680 = vcvt.s32.f32 %v616
    %v681 = vcvt.s32.f32 %v617
    %v682 = vcvt.s32.f32 %v618
    %v683 = vcvt.s32.f32 %v619
    %v684 = vcvt.s32.f32 %v620
    %v685 = vcvt.s32.f32 %v621
    %v686 = vcvt.s32.f32 %v622
    %v687 = vcvt.s32.f32 %v623
    %v688 = vcvt.s32.f32 %v624
    %v689 = vcvt.s32.f32 %v625
    %v690 = vcvt.s32.f32 %v626
    %v691 = vcvt.s32.f32 %v627
    %v692 = vcvt.s32.f32 %v628
    %v693 = vcvt.s32.f32 %v629
    %v694 = vcvt.s32.f32 %v630
    %v695 = vcvt.s32.f32 %v631
    %v696 = vcvt.s32.f32 %v632
    %v697 = vcvt.s32.f32 %v633
    %v698 = vcvt.s32.f32 %v634
    %v699 = vcvt.s32.f32 %v635
    %v700 = vcvt.s32.f32 %v636
    %v701 = vcvt.s32.f32 %v637
    %v702 = vcvt.s32.f32 %v638
    %v703 = vcvt.s32.f32 %v639
    %v704 = vcvt.s32.f32 %v640
    %v705 = vcvt.s32.f32 %v641
    %v706 = vcvt.s32.f32 %v642
    %v707 = vcvt.s32.f32 %v643
    %v708 = vcvt.s32.f32 %v644
    %v709 = vcvt.s32.f32 %v645
    %v710 = vcvt.s32.f32 %v646
    %v711 = vcvt.s32.f32 %v647
    %v712 = vcvt.s32.f32 %v648
    %v713 = vpack.c.bf16 %v651, %v649
    %v714 = vpack.c.bf16 %v652, %v650
    %v715 = vpack.c.bf16 %v655, %v653
    %v716 = vpack.c.bf16 %v656, %v654
    %v717 = vpack.c.bf16 %v659, %v657
    %v718 = vpack.c.bf16 %v660, %v658
    %v719 = vpack.c.bf16 %v663, %v661
    %v720 = vpack.c.bf16 %v664, %v662
    %v721 = vpack.c.bf16 %v667, %v665
    %v722 = vpack.c.bf16 %v668, %v666
    %v723 = vpack.c.bf16 %v671, %v669
    %v724 = vpack.c.bf16 %v672, %v670
    %v725 = vpack.c.bf16 %v675, %v673
    %v726 = vpack.c.bf16 %v676, %v674
    %v727 = vpack.c.bf16 %v679, %v677
    %v728 = vpack.c.bf16 %v680, %v678
    %v729 = vpack.c.bf16 %v683, %v681
    %v730 = vpack.c.bf16 %v684, %v682
    %v731 = vpack.c.bf16 %v687, %v685
    %v732 = vpack.c.bf16 %v688, %v686
    %v733 = vpack.c.bf16 %v691, %v689
    %v734 = vpack.c.bf16 %v692, %v690
    %v735 = vpack.c.bf16 %v695, %v693
    %v736 = vpack.c.bf16 %v696, %v694
    %v737 = vpack.c.bf16 %v699, %v697
    %v738 = vpack.c.bf16 %v700, %v698
    %v739 = vpack.c.bf16 %v703, %v701
    %v740 = vpack.c.bf16 %v704, %v702
    %v741 = vpack.c.bf16 %v707, %v705
    %v742 = vpack.c.bf16 %v708, %v706
    %v743 = vpack.c.bf16 %v711, %v709
    %v744 = vpack.c.bf16 %v712, %v710
    %v745 = vld [vmem:[#allocation5] sm:$0xf]
    %v746 = vld [vmem:[#allocation5 + $0x4] sm:$0xf]
    %v747 = vld [vmem:[#allocation5 + $0x8] sm:$0xf]
    %v748 = vld [vmem:[#allocation5 + $0xc] sm:$0xf]
    %v749 = vld [vmem:[#allocation5 + $0x10] sm:$0xf]
    %v750 = vld [vmem:[#allocation5 + $0x14] sm:$0xf]
    %v751 = vld [vmem:[#allocation5 + $0x18] sm:$0xf]
    %v752 = vld [vmem:[#allocation5 + $0x1c] sm:$0xf]
    %v753 = vld [vmem:[#allocation5 + $0x20] sm:$0xf]
    %v754 = vld [vmem:[#allocation5 + $0x24] sm:$0xf]
    %v755 = vld [vmem:[#allocation5 + $0x28] sm:$0xf]
    %v756 = vld [vmem:[#allocation5 + $0x2c] sm:$0xf]
    %v757 = vld [vmem:[#allocation5 + $0x30] sm:$0xf]
    %v758 = vld [vmem:[#allocation5 + $0x34] sm:$0xf]
    %v759 = vld [vmem:[#allocation5 + $0x38] sm:$0xf]
    %v760 = vld [vmem:[#allocation5 + $0x3c] sm:$0xf]
    %v761 = vld [vmem:[#allocation5 + $0x40] sm:$0xf]
    %v762 = vld [vmem:[#allocation5 + $0x44] sm:$0xf]
    %v763 = vld [vmem:[#allocation5 + $0x48] sm:$0xf]
    %v764 = vld [vmem:[#allocation5 + $0x4c] sm:$0xf]
    %v765 = vld [vmem:[#allocation5 + $0x50] sm:$0xf]
    %v766 = vld [vmem:[#allocation5 + $0x54] sm:$0xf]
    %v767 = vld [vmem:[#allocation5 + $0x58] sm:$0xf]
    %v768 = vld [vmem:[#allocation5 + $0x5c] sm:$0xf]
    %v769 = vld [vmem:[#allocation5 + $0x60] sm:$0xf]
    %v770 = vld [vmem:[#allocation5 + $0x64] sm:$0xf]
    %v771 = vld [vmem:[#allocation5 + $0x68] sm:$0xf]
    %v772 = vld [vmem:[#allocation5 + $0x6c] sm:$0xf]
    %v773 = vld [vmem:[#allocation5 + $0x70] sm:$0xf]
    %v774 = vld [vmem:[#allocation5 + $0x74] sm:$0xf]
    %v775 = vld [vmem:[#allocation5 + $0x78] sm:$0xf]
    %v776 = vld [vmem:[#allocation5 + $0x7c] sm:$0xf]
    %777 = vxpose.xlu0.c.b16.start [1/8] %v713, 128
    %778 = vxpose.xlu0.c.b16.cont [2/8] %v715, 128
    %779 = vxpose.xlu0.c.b16.cont [3/8] %v717, 128
    %780 = vxpose.xlu0.c.b16.cont [4/8] %v719, 128
    %781 = vxpose.xlu0.c.b16.cont [5/8] %v721, 128
    %782 = vxpose.xlu0.c.b16.cont [6/8] %v723, 128
    %783 = vxpose.xlu0.c.b16.cont [7/8] %v725, 128
    %784 = vxpose.xlu0.c.b16.end [8/8] %v727, 128
    %v785 = vpop.trf.xlu0
    %v786 = vpop.trf.xlu0
    %v787 = vpop.trf.xlu0
    %v788 = vpop.trf.xlu0
    %v789 = vpop.trf.xlu0
    %v790 = vpop.trf.xlu0
    %v791 = vpop.trf.xlu0
    %v792 = vpop.trf.xlu0
    %793 = vxpose.xlu0.c.b16.start [1/8] %v714, 128
    %794 = vxpose.xlu0.c.b16.cont [2/8] %v716, 128
    %795 = vxpose.xlu0.c.b16.cont [3/8] %v718, 128
    %796 = vxpose.xlu0.c.b16.cont [4/8] %v720, 128
    %797 = vxpose.xlu0.c.b16.cont [5/8] %v722, 128
    %798 = vxpose.xlu0.c.b16.cont [6/8] %v724, 128
    %799 = vxpose.xlu0.c.b16.cont [7/8] %v726, 128
    %800 = vxpose.xlu0.c.b16.end [8/8] %v728, 128
    %v801 = vpop.trf.xlu0
    %v802 = vpop.trf.xlu0
    %v803 = vpop.trf.xlu0
    %v804 = vpop.trf.xlu0
    %v805 = vpop.trf.xlu0
    %v806 = vpop.trf.xlu0
    %v807 = vpop.trf.xlu0
    %v808 = vpop.trf.xlu0
    %809 = vxpose.xlu0.c.b16.start [1/8] %v729, 128
    %810 = vxpose.xlu0.c.b16.cont [2/8] %v731, 128
    %811 = vxpose.xlu0.c.b16.cont [3/8] %v733, 128
    %812 = vxpose.xlu0.c.b16.cont [4/8] %v735, 128
    %813 = vxpose.xlu0.c.b16.cont [5/8] %v737, 128
    %814 = vxpose.xlu0.c.b16.cont [6/8] %v739, 128
    %815 = vxpose.xlu0.c.b16.cont [7/8] %v741, 128
    %816 = vxpose.xlu0.c.b16.end [8/8] %v743, 128
    %v817 = vpop.trf.xlu0
    %v818 = vpop.trf.xlu0
    %v819 = vpop.trf.xlu0
    %v820 = vpop.trf.xlu0
    %v821 = vpop.trf.xlu0
    %v822 = vpop.trf.xlu0
    %v823 = vpop.trf.xlu0
    %v824 = vpop.trf.xlu0
    %825 = vxpose.xlu0.c.b16.start [1/8] %v730, 128
    %826 = vxpose.xlu0.c.b16.cont [2/8] %v732, 128
    %827 = vxpose.xlu0.c.b16.cont [3/8] %v734, 128
    %828 = vxpose.xlu0.c.b16.cont [4/8] %v736, 128
    %829 = vxpose.xlu0.c.b16.cont [5/8] %v738, 128
    %830 = vxpose.xlu0.c.b16.cont [6/8] %v740, 128
    %831 = vxpose.xlu0.c.b16.cont [7/8] %v742, 128
    %832 = vxpose.xlu0.c.b16.end [8/8] %v744, 128
    %v833 = vpop.trf.xlu0
    %v834 = vpop.trf.xlu0
    %v835 = vpop.trf.xlu0
    %v836 = vpop.trf.xlu0
    %v837 = vpop.trf.xlu0
    %v838 = vpop.trf.xlu0
    %v839 = vpop.trf.xlu0
    %v840 = vpop.trf.xlu0
    %v873 = vunpack.c.l.b16 %v745
    %v874 = vunpack.c.l.b16 %v746
    %v875 = vunpack.c.l.b16 %v747
    %v876 = vunpack.c.l.b16 %v748
    %v877 = vunpack.c.l.b16 %v749
    %v878 = vunpack.c.l.b16 %v750
    %v879 = vunpack.c.l.b16 %v751
    %v880 = vunpack.c.l.b16 %v752
    %v881 = vunpack.c.l.b16 %v753
    %v882 = vunpack.c.l.b16 %v754
    %v883 = vunpack.c.l.b16 %v755
    %v884 = vunpack.c.l.b16 %v756
    %v885 = vunpack.c.l.b16 %v757
    %v886 = vunpack.c.l.b16 %v758
    %v887 = vunpack.c.l.b16 %v759
    %v888 = vunpack.c.l.b16 %v760
    %v889 = vunpack.c.l.b16 %v761
    %v890 = vunpack.c.l.b16 %v762
    %v891 = vunpack.c.l.b16 %v763
    %v892 = vunpack.c.l.b16 %v764
    %v893 = vunpack.c.l.b16 %v765
    %v894 = vunpack.c.l.b16 %v766
    %v895 = vunpack.c.l.b16 %v767
    %v896 = vunpack.c.l.b16 %v768
    %v897 = vunpack.c.l.b16 %v769
    %v898 = vunpack.c.l.b16 %v770
    %v899 = vunpack.c.l.b16 %v771
    %v900 = vunpack.c.l.b16 %v772
    %v901 = vunpack.c.l.b16 %v773
    %v902 = vunpack.c.l.b16 %v774
    %v903 = vunpack.c.l.b16 %v775
    %v904 = vunpack.c.l.b16 %v776
    %v905 = vpack.c.b16 %v874, %v873
    %v906 = vpack.c.b16 %v876, %v875
    %v907 = vpack.c.b16 %v878, %v877
    %v908 = vpack.c.b16 %v880, %v879
    %v909 = vpack.c.b16 %v882, %v881
    %v910 = vpack.c.b16 %v884, %v883
    %v911 = vpack.c.b16 %v886, %v885
    %v912 = vpack.c.b16 %v888, %v887
    %v913 = vpack.c.b16 %v890, %v889
    %v914 = vpack.c.b16 %v892, %v891
    %v915 = vpack.c.b16 %v894, %v893
    %v916 = vpack.c.b16 %v896, %v895
    %v917 = vpack.c.b16 %v898, %v897
    %v918 = vpack.c.b16 %v900, %v899
    %v919 = vpack.c.b16 %v902, %v901
    %v920 = vpack.c.b16 %v904, %v903
    %937 = vmatprep.subr.bf16.mxu0 0
    %938 = vmatpush1.bf16.msra.mxu0 %v905
    %939 = vmatprep.subr.bf16.mxu0 0
    %940 = vmatpush1.bf16.msra.mxu0 %v906
    %941 = vmatprep.subr.bf16.mxu0 0
    %942 = vmatpush1.bf16.msra.mxu0 %v907
    %943 = vmatprep.subr.bf16.mxu0 0
    %944 = vmatpush1.bf16.msra.mxu0 %v908
    %945 = vmatprep.subr.bf16.mxu0 0
    %946 = vmatpush1.bf16.msra.mxu0 %v909
    %947 = vmatprep.subr.bf16.mxu0 0
    %948 = vmatpush1.bf16.msra.mxu0 %v910
    %949 = vmatprep.subr.bf16.mxu0 0
    %950 = vmatpush1.bf16.msra.mxu0 %v911
    %951 = vmatprep.subr.bf16.mxu0 0
    %952 = vmatpush1.bf16.msra.mxu0 %v912
    %953 = vmatprep.subr.bf16.mxu0 0
    %954 = vmatpush1.bf16.msra.mxu0 %v913
    %955 = vmatprep.subr.bf16.mxu0 0
    %956 = vmatpush1.bf16.msra.mxu0 %v914
    %957 = vmatprep.subr.bf16.mxu0 0
    %958 = vmatpush1.bf16.msra.mxu0 %v915
    %959 = vmatprep.subr.bf16.mxu0 0
    %960 = vmatpush1.bf16.msra.mxu0 %v916
    %961 = vmatprep.subr.bf16.mxu0 0
    %962 = vmatpush1.bf16.msra.mxu0 %v917
    %963 = vmatprep.subr.bf16.mxu0 0
    %964 = vmatpush1.bf16.msra.mxu0 %v918
    %965 = vmatprep.subr.bf16.mxu0 0
    %966 = vmatpush1.bf16.msra.mxu0 %v919
    %967 = vmatprep.subr.bf16.mxu0 0
    %968 = vmatpush1.bf16.msra.mxu0 %v920
    %969 = vmatprep.mubr.bf16.mxu0 %v817
    %970 = vmatmul.mubr.bf16.gmra.mrb[0].mxu0 %v785
    %v971 = vpop.f32.mrb[0].mxu0
    %v972 = vadd.f32 0.0, %v971
    %v973 = vpop.f32.mrb[0].mxu0
    %v974 = vpop.f32.mrb[0].mxu0
    %v975 = vadd.f32 0.0, %v974
    %v976 = vpop.f32.mrb[0].mxu0
    %977 = vmatprep.mubr.bf16.mxu0 %v818
    %978 = vmatmul.mubr.bf16.gmra.mrb[0].mxu0 %v786
    %v979 = vpop.f32.mrb[0].mxu0
    %v980 = vadd.f32 0.0, %v979
    %v981 = vpop.f32.mrb[0].mxu0
    %v982 = vpop.f32.mrb[0].mxu0
    %v983 = vadd.f32 0.0, %v982
    %v984 = vpop.f32.mrb[0].mxu0
    %985 = vmatprep.mubr.bf16.mxu0 %v819
    %986 = vmatmul.mubr.bf16.gmra.mrb[0].mxu0 %v787
    %v987 = vpop.f32.mrb[0].mxu0
    %v988 = vadd.f32 0.0, %v987
    %v989 = vpop.f32.mrb[0].mxu0
    %v990 = vpop.f32.mrb[0].mxu0
    %v991 = vadd.f32 0.0, %v990
    %v992 = vpop.f32.mrb[0].mxu0
    %993 = vmatprep.mubr.bf16.mxu0 %v820
    %994 = vmatmul.mubr.bf16.gmra.mrb[0].mxu0 %v788
    %v995 = vpop.f32.mrb[0].mxu0
    %v996 = vadd.f32 0.0, %v995
    %v997 = vpop.f32.mrb[0].mxu0
    %v998 = vpop.f32.mrb[0].mxu0
    %v999 = vadd.f32 0.0, %v998
    %v1000 = vpop.f32.mrb[0].mxu0
    %1001 = vmatprep.mubr.bf16.mxu0 %v821
    %1002 = vmatmul.mubr.bf16.gmra.mrb[0].mxu0 %v789
    %v1003 = vpop.f32.mrb[0].mxu0
    %v1004 = vadd.f32 0.0, %v1003
    %v1005 = vpop.f32.mrb[0].mxu0
    %v1006 = vpop.f32.mrb[0].mxu0
    %v1007 = vadd.f32 0.0, %v1006
    %v1008 = vpop.f32.mrb[0].mxu0
    %1009 = vmatprep.mubr.bf16.mxu0 %v822
    %1010 = vmatmul.mubr.bf16.gmra.mrb[0].mxu0 %v790
    %v1011 = vpop.f32.mrb[0].mxu0
    %v1012 = vadd.f32 0.0, %v1011
    %v1013 = vpop.f32.mrb[0].mxu0
    %v1014 = vpop.f32.mrb[0].mxu0
    %v1015 = vadd.f32 0.0, %v1014
    %v1016 = vpop.f32.mrb[0].mxu0
    %1017 = vmatprep.mubr.bf16.mxu0 %v823
    %1018 = vmatmul.mubr.bf16.gmra.mrb[0].mxu0 %v791
    %v1019 = vpop.f32.mrb[0].mxu0
    %v1020 = vadd.f32 0.0, %v1019
    %v1021 = vpop.f32.mrb[0].mxu0
    %v1022 = vpop.f32.mrb[0].mxu0
    %v1023 = vadd.f32 0.0, %v1022
    %v1024 = vpop.f32.mrb[0].mxu0
    %1025 = vmatprep.mubr.bf16.mxu0 %v824
    %1026 = vmatmul.mubr.bf16.gmra.mrb[0].mxu0 %v792
    %v1027 = vpop.f32.mrb[0].mxu0
    %v1028 = vadd.f32 0.0, %v1027
    %v1029 = vpop.f32.mrb[0].mxu0
    %v1030 = vpop.f32.mrb[0].mxu0
    %v1031 = vadd.f32 0.0, %v1030
    %v1032 = vpop.f32.mrb[0].mxu0
    %1033 = vmatprep.mubr.bf16.mxu0 %v833
    %1034 = vmatmul.mubr.bf16.gmra.mrb[0].mxu0 %v801
    %v1035 = vpop.f32.mrb[0].mxu0
    %v1036 = vadd.f32 0.0, %v1035
    %v1037 = vpop.f32.mrb[0].mxu0
    %v1038 = vpop.f32.mrb[0].mxu0
    %v1039 = vadd.f32 0.0, %v1038
    %v1040 = vpop.f32.mrb[0].mxu0
    %1041 = vmatprep.mubr.bf16.mxu0 %v834
    %1042 = vmatmul.mubr.bf16.gmra.mrb[0].mxu0 %v802
    %v1043 = vpop.f32.mrb[0].mxu0
    %v1044 = vadd.f32 0.0, %v1043
    %v1045 = vpop.f32.mrb[0].mxu0
    %v1046 = vpop.f32.mrb[0].mxu0
    %v1047 = vadd.f32 0.0, %v1046
    %v1048 = vpop.f32.mrb[0].mxu0
    %1049 = vmatprep.mubr.bf16.mxu0 %v835
    %1050 = vmatmul.mubr.bf16.gmra.mrb[0].mxu0 %v803
    %v1051 = vpop.f32.mrb[0].mxu0
    %v1052 = vadd.f32 0.0, %v1051
    %v1053 = vpop.f32.mrb[0].mxu0
    %v1054 = vpop.f32.mrb[0].mxu0
    %v1055 = vadd.f32 0.0, %v1054
    %v1056 = vpop.f32.mrb[0].mxu0
    %1057 = vmatprep.mubr.bf16.mxu0 %v836
    %1058 = vmatmul.mubr.bf16.gmra.mrb[0].mxu0 %v804
    %v1059 = vpop.f32.mrb[0].mxu0
    %v1060 = vadd.f32 0.0, %v1059
    %v1061 = vpop.f32.mrb[0].mxu0
    %v1062 = vpop.f32.mrb[0].mxu0
    %v1063 = vadd.f32 0.0, %v1062
    %v1064 = vpop.f32.mrb[0].mxu0
    %1065 = vmatprep.mubr.bf16.mxu0 %v837
    %1066 = vmatmul.mubr.bf16.gmra.mrb[0].mxu0 %v805
    %v1067 = vpop.f32.mrb[0].mxu0
    %v1068 = vadd.f32 0.0, %v1067
    %v1069 = vpop.f32.mrb[0].mxu0
    %v1070 = vpop.f32.mrb[0].mxu0
    %v1071 = vadd.f32 0.0, %v1070
    %v1072 = vpop.f32.mrb[0].mxu0
    %1073 = vmatprep.mubr.bf16.mxu0 %v838
    %1074 = vmatmul.mubr.bf16.gmra.mrb[0].mxu0 %v806
    %v1075 = vpop.f32.mrb[0].mxu0
    %v1076 = vadd.f32 0.0, %v1075
    %v1077 = vpop.f32.mrb[0].mxu0
    %v1078 = vpop.f32.mrb[0].mxu0
    %v1079 = vadd.f32 0.0, %v1078
    %v1080 = vpop.f32.mrb[0].mxu0
    %1081 = vmatprep.mubr.bf16.mxu0 %v839
    %1082 = vmatmul.mubr.bf16.gmra.mrb[0].mxu0 %v807
    %v1083 = vpop.f32.mrb[0].mxu0
    %v1084 = vadd.f32 0.0, %v1083
    %v1085 = vpop.f32.mrb[0].mxu0
    %v1086 = vpop.f32.mrb[0].mxu0
    %v1087 = vadd.f32 0.0, %v1086
    %v1088 = vpop.f32.mrb[0].mxu0
    %1089 = vmatprep.mubr.bf16.mxu0 %v840
    %1090 = vmatmul.mubr.bf16.gmra.mrb[0].mxu0 %v808
    %v1091 = vpop.f32.mrb[0].mxu0
    %v1092 = vadd.f32 0.0, %v1091
    %v1093 = vpop.f32.mrb[0].mxu0
    %v1094 = vpop.f32.mrb[0].mxu0
    %v1095 = vadd.f32 0.0, %v1094
    %v1096 = vpop.f32.mrb[0].mxu0
    %1097 = vdwg.mxu0
    %1098 = vst [vmem:[#allocation7] sm:$0xff] %v972
    %1099 = vst [vmem:[#allocation7 + $0x8] sm:$0xff] %v975
    %1100 = vst [vmem:[#allocation7 + $0x10] sm:$0xff] %v980
    %1101 = vst [vmem:[#allocation7 + $0x18] sm:$0xff] %v983
    %1102 = vst [vmem:[#allocation7 + $0x20] sm:$0xff] %v988
    %1103 = vst [vmem:[#allocation7 + $0x28] sm:$0xff] %v991
    %1104 = vst [vmem:[#allocation7 + $0x30] sm:$0xff] %v996
    %1105 = vst [vmem:[#allocation7 + $0x38] sm:$0xff] %v999
    %1106 = vst [vmem:[#allocation7 + $0x40] sm:$0xff] %v1004
    %1107 = vst [vmem:[#allocation7 + $0x48] sm:$0xff] %v1007
    %1108 = vst [vmem:[#allocation7 + $0x50] sm:$0xff] %v1012
    %1109 = vst [vmem:[#allocation7 + $0x58] sm:$0xff] %v1015
    %1110 = vst [vmem:[#allocation7 + $0x60] sm:$0xff] %v1020
    %1111 = vst [vmem:[#allocation7 + $0x68] sm:$0xff] %v1023
    %1112 = vst [vmem:[#allocation7 + $0x70] sm:$0xff] %v1028
    %1113 = vst [vmem:[#allocation7 + $0x78] sm:$0xff] %v1031
    %1114 = vst [vmem:[#allocation7 + $0x80] sm:$0xff] %v1036
    %1115 = vst [vmem:[#allocation7 + $0x88] sm:$0xff] %v1039
    %1116 = vst [vmem:[#allocation7 + $0x90] sm:$0xff] %v1044
    %1117 = vst [vmem:[#allocation7 + $0x98] sm:$0xff] %v1047
    %1118 = vst [vmem:[#allocation7 + $0xa0] sm:$0xff] %v1052
    %1119 = vst [vmem:[#allocation7 + $0xa8] sm:$0xff] %v1055
    %1120 = vst [vmem:[#allocation7 + $0xb0] sm:$0xff] %v1060
    %1121 = vst [vmem:[#allocation7 + $0xb8] sm:$0xff] %v1063
    %1122 = vst [vmem:[#allocation7 + $0xc0] sm:$0xff] %v1068
    %1123 = vst [vmem:[#allocation7 + $0xc8] sm:$0xff] %v1071
    %1124 = vst [vmem:[#allocation7 + $0xd0] sm:$0xff] %v1076
    %1125 = vst [vmem:[#allocation7 + $0xd8] sm:$0xff] %v1079
    %1126 = vst [vmem:[#allocation7 + $0xe0] sm:$0xff] %v1084
    %1127 = vst [vmem:[#allocation7 + $0xe8] sm:$0xff] %v1087
    %1128 = vst [vmem:[#allocation7 + $0xf0] sm:$0xff] %v1092
    %1129 = vst [vmem:[#allocation7 + $0xf8] sm:$0xff] %v1095
    // Predicated region
    $region18: #{tpu_custom_call.1} parent=1 // pred_check
      _
    $region19: #{tpu_custom_call.1} parent=1 // pred_check_branch
      %1131 = sbr.rel (0) target = $region21
    $region20: #{tpu_custom_call.1} parent=1 // pred_region
      %s1133 = ssub.s32 4096, 4096
      %1134 = vsyncadd [#allocation4], %s1133
      %s1135 = sshll.u32 [#allocation7], 4
      %s1136 = int_to_ptr.vmem [resolvable:$true] %s1135
      %1141 = dma.vmem_to_hbm [thread:$0]  %s1136, 4096, %s2, [#allocation4], 128, 128, 8
    $region21: #{tpu_custom_call.1} parent=1 // pred_fallthru
      _
    // Predicated region
    $region22: #{tpu_custom_call.1} parent=1 // pred_check
      _
    $region23: #{tpu_custom_call.1} parent=1 // pred_check_branch
      %1143 = sbr.rel (0) target = $region25
    $region24: #{tpu_custom_call.1} parent=1 // pred_region
      %1144 = dma.done [#allocation4], 4096
    $region25: #{tpu_custom_call.1} parent=1 // pred_fallthru
      _
    %1145 = vsyncpa [#allocation3], 1
    %1146 = vsyncpa [#allocation6], 1
    %1147 = vsyncpa [#allocation4], 1

</llo_original>
